<compile_context>
chip_gen: v7x
topology: tpu7x:2x2x1
jax: 0.10.0
libtpu: 0.0.40
codegen_flags: <defaults>
</compile_context>

<pallas_src>
import functools
import math

import jax
import jax.numpy as jnp
from jax.experimental import pallas as pl
from jax.experimental.pallas import tpu as pltpu

EXPANSION = 4       # Bottleneck block expansion (block.expansion in the torch code)
BN_EPS = 1e-5


def _round_up(v, m):
    return ((v + m - 1) // m) * m


def _pick_tk(kp):
    """Largest K tile <= 1024 (multiple of 128) that divides kp."""
    m = kp // 128
    if m <= 8:
        return kp
    best = 1
    for d in range(2, 9):
        if m % d == 0:
            best = d
    return 128 * best


# ---------------------------------------------------------------------------
# Pallas kernels
# ---------------------------------------------------------------------------
def _gemm_bn_kernel(*refs, apply_relu, has_residual):
    """bf16 GEMM with K-accumulation in f32 VMEM scratch.

    Epilogue (last K step, all in f32): folded-BN scale/bias, optional
    residual add, optional ReLU, cast to the bf16 output."""
    if has_residual:
        x_ref, w_ref, scale_ref, bias_ref, res_ref, o_ref, acc_ref = refs
    else:
        x_ref, w_ref, scale_ref, bias_ref, o_ref, acc_ref = refs
        res_ref = None

    @pl.when(pl.program_id(2) == 0)
    def _():
        acc_ref[...] = jnp.zeros_like(acc_ref)

    acc_ref[...] += jnp.dot(x_ref[...], w_ref[...],
                            preferred_element_type=jnp.float32)

    @pl.when(pl.program_id(2) == pl.num_programs(2) - 1)
    def _():
        out = acc_ref[...] * scale_ref[...] + bias_ref[...]
        if has_residual:
            out = out + res_ref[...].astype(jnp.float32)
        if apply_relu:
            out = jnp.maximum(out, 0.0)
        o_ref[...] = out.astype(o_ref.dtype)


def _maxpool_kernel(ee_ref, eo_ref, oe_ref, oo_ref, o_ref):
    """3x3/s2/p1 max-pool on even/odd decomposed inputs (9 taps, in-register)."""
    ee = ee_ref[0]          # (Ho+1, Wo+1, C)  rows 2h,   cols 2w
    eo = eo_ref[0]          # (Ho+1, Wo,   C)  rows 2h,   cols 2w+1
    oe = oe_ref[0]          # (Ho,   Wo+1, C)  rows 2h+1, cols 2w
    oo = oo_ref[0]          # (Ho,   Wo,   C)  rows 2h+1, cols 2w+1
    ho, wo, _ = oo.shape
    m = jnp.maximum(ee[:ho, :wo], ee[:ho, 1:wo + 1])
    m = jnp.maximum(m, ee[1:ho + 1, :wo])
    m = jnp.maximum(m, ee[1:ho + 1, 1:wo + 1])
    m = jnp.maximum(m, eo[:ho])
    m = jnp.maximum(m, eo[1:ho + 1])
    m = jnp.maximum(m, oe[:, :wo])
    m = jnp.maximum(m, oe[:, 1:wo + 1])
    m = jnp.maximum(m, oo)
    o_ref[0] = m


def _avgpool_fc_kernel(x_ref, w_ref, b_ref, o_ref):
    """AvgPool2d(7) (mean over the 49 positions) + Linear, one batch element."""
    x = x_ref[0].astype(jnp.float32)                    # (H*W, C)
    pooled = jnp.mean(x, axis=0, keepdims=True)         # (1, C)
    out = jnp.dot(pooled, w_ref[...], preferred_element_type=jnp.float32)
    o_ref[0] = out + b_ref[...]


# ---------------------------------------------------------------------------
# Pallas wrappers
# ---------------------------------------------------------------------------
def matmul_bn_act(patches, w2d, scale, bias, relu, residual=None):
    """patches (M,K) bf16 @ w2d (K,N) bf16 with fused BN/residual/ReLU -> (M,N) bf16."""
    M, K = patches.shape
    K2, N = w2d.shape
    assert K == K2
    patches = patches.astype(jnp.bfloat16)
    w2d = w2d.astype(jnp.bfloat16)

    # Pad K to a lane multiple (also fixes the K=27 stem conv alignment).
    Kp = _round_up(K, 128)
    if Kp != K:
        patches = jnp.pad(patches, ((0, 0), (0, Kp - K)))
        w2d = jnp.pad(w2d, ((0, Kp - K), (0, 0)))

    # Adaptive M tile: big tiles for the large stem maps, snug multiples of 16
    # for the small late-stage maps (M = 196 / 49 etc.).
    TM = 256 if M >= 1024 else _round_up(M, 16)
    Mp = _round_up(M, TM)
    if Mp != M:
        patches = jnp.pad(patches, ((0, Mp - M), (0, 0)))

    TN = N if N <= 256 else 256        # all N here are 64/128/256 or multiples of 256
    TK = _pick_tk(Kp)

    has_res = residual is not None
    inputs = [patches, w2d, scale, bias]
    in_specs = [
        pl.BlockSpec((TM, TK), lambda i, j, k: (i, k)),
        pl.BlockSpec((TK, TN), lambda i, j, k: (k, j)),
        pl.BlockSpec((1, TN), lambda i, j, k: (0, j)),
        pl.BlockSpec((1, TN), lambda i, j, k: (0, j)),
    ]
    if has_res:
        res = residual.astype(jnp.bfloat16)
        if Mp != M:
            res = jnp.pad(res, ((0, Mp - M), (0, 0)))
        inputs.append(res)
        in_specs.append(pl.BlockSpec((TM, TN), lambda i, j, k: (i, j)))

    out = pl.pallas_call(
        functools.partial(_gemm_bn_kernel, apply_relu=relu, has_residual=has_res),
        out_shape=jax.ShapeDtypeStruct((Mp, N), jnp.bfloat16),
        grid_spec=pltpu.PrefetchScalarGridSpec(
            num_scalar_prefetch=0,
            grid=(Mp // TM, N // TN, Kp // TK),
            in_specs=in_specs,
            out_specs=pl.BlockSpec((TM, TN), lambda i, j, k: (i, j)),
            scratch_shapes=[pltpu.VMEM((TM, TN), jnp.float32)],
        ),
        compiler_params=pltpu.CompilerParams(
            dimension_semantics=("parallel", "parallel", "arbitrary")),
    )(*inputs)
    return out[:M]


def _im2col(x, k, stride, padding, dilation):
    """x: (N, H, W, C) bf16 -> ((N*Ho*Wo, k*k*C), Ho, Wo).  Pure JAX glue."""
    N, H, W, C = x.shape
    Ho = (H + 2 * padding - dilation * (k - 1) - 1) // stride + 1
    Wo = (W + 2 * padding - dilation * (k - 1) - 1) // stride + 1
    if padding > 0:
        x = jnp.pad(x, ((0, 0), (padding, padding), (padding, padding), (0, 0)))
    cols = []
    for i in range(k):
        for j in range(k):
            hs, ws = i * dilation, j * dilation
            sl = x[:, hs:hs + (Ho - 1) * stride + 1:stride,
                     ws:ws + (Wo - 1) * stride + 1:stride, :]
            cols.append(sl)
    patches = jnp.concatenate(cols, axis=-1)          # (N, Ho, Wo, k*k*C)
    return patches.reshape(N * Ho * Wo, k * k * C), Ho, Wo


def conv_bn_act(x, p, stride=1, dilation=1, relu=True, residual=None):
    """Conv2d (bias=False) + folded InPlaceABNSync + optional residual + ReLU."""
    kh, kw, cin, cout = p["w"].shape
    N = x.shape[0]
    if kh == 1:
        xs = x if stride == 1 else x[:, ::stride, ::stride, :]
        Ho, Wo = xs.shape[1], xs.shape[2]
        patches = xs.reshape(N * Ho * Wo, cin)
    else:
        padding = dilation                      # 3x3 convs use padding == dilation
        patches, Ho, Wo = _im2col(x, kh, stride, padding, dilation)
    w2d = p["w"].reshape(kh * kw * cin, cout)
    res2d = None
    if residual is not None:
        res2d = residual.reshape(N * Ho * Wo, cout)
    out = matmul_bn_act(patches, w2d, p["scale"], p["bias"], relu, res2d)
    return out.reshape(N, Ho, Wo, cout)


def maxpool3x3_s2p1(x):
    """MaxPool2d(kernel_size=3, stride=2, padding=1), 9-tap max done in-kernel."""
    N, H, W, C = x.shape
    Ho = (H - 1) // 2 + 1
    Wo = (W - 1) // 2 + 1
    xp = jnp.pad(x, ((0, 0), (1, 1), (1, 1), (0, 0)), constant_values=-jnp.inf)
    # Even/odd row/col decomposition so the kernel only needs unit-stride slices.
    ee = xp[:, 0:2 * Ho + 1:2, 0:2 * Wo + 1:2, :]     # (N, Ho+1, Wo+1, C)
    eo = xp[:, 0:2 * Ho + 1:2, 1:2 * Wo:2, :]         # (N, Ho+1, Wo,   C)
    oe = xp[:, 1:2 * Ho:2, 0:2 * Wo + 1:2, :]         # (N, Ho,   Wo+1, C)
    oo = xp[:, 1:2 * Ho:2, 1:2 * Wo:2, :]             # (N, Ho,   Wo,   C)

    Cb = 128 if C % 128 == 0 else C

    def spec(h, w_):
        return pl.BlockSpec((1, h, w_, Cb), lambda n, c: (n, 0, 0, c))

    out = pl.pallas_call(
        _maxpool_kernel,
        out_shape=jax.ShapeDtypeStruct((N, Ho, Wo, C), x.dtype),
        grid_spec=pltpu.PrefetchScalarGridSpec(
            num_scalar_prefetch=0,
            grid=(N, C // Cb),
            in_specs=[spec(Ho + 1, Wo + 1), spec(Ho + 1, Wo),
                      spec(Ho, Wo + 1), spec(Ho, Wo)],
            out_specs=spec(Ho, Wo),
        ),
        compiler_params=pltpu.CompilerParams(
            dimension_semantics=("parallel", "parallel")),
    )(ee, eo, oe, oo)
    return out


def avgpool7_fc(x, fc_w, fc_b):
    """AvgPool2d(7, stride=1) on the 7x7 map + flatten + Linear, batched over N."""
    N, H, W, C = x.shape
    assert (H, W) == (7, 7), "AvgPool2d(7) expects a 7x7 feature map here"
    num_classes = fc_w.shape[1]
    NCp = _round_up(num_classes, 128)               # lane-dense output
    w = jnp.pad(fc_w, ((0, 0), (0, NCp - num_classes))).astype(jnp.float32)
    b = jnp.pad(fc_b, ((0, 0), (0, NCp - num_classes))).astype(jnp.float32)
    x3 = x.reshape(N, H * W, C)

    out = pl.pallas_call(
        _avgpool_fc_kernel,
        out_shape=jax.ShapeDtypeStruct((N, 1, NCp), jnp.float32),
        grid_spec=pltpu.PrefetchScalarGridSpec(
            num_scalar_prefetch=0,
            grid=(N,),
            in_specs=[
                pl.BlockSpec((1, H * W, C), lambda n: (n, 0, 0)),
                pl.BlockSpec((C, NCp), lambda n: (0, 0)),
                pl.BlockSpec((1, NCp), lambda n: (0, 0)),
            ],
            out_specs=pl.BlockSpec((1, 1, NCp), lambda n: (n, 0, 0)),
        ),
        compiler_params=pltpu.CompilerParams(dimension_semantics=("parallel",)),
    )(x3, w, b)
    return out[:, 0, :num_classes]


# ---------------------------------------------------------------------------
# Parameter construction (deterministic, synthetic)
# ---------------------------------------------------------------------------
def _make_conv_bn(key, cin, cout, k):
    kw_, kg, kb, km, kv = jax.random.split(key, 5)
    fan_in = k * k * cin
    w = jax.random.normal(kw_, (k, k, cin, cout), jnp.float32) / math.sqrt(fan_in)
    gamma = 1.0 + 0.1 * jax.random.normal(kg, (cout,), jnp.float32)
    beta = 0.1 * jax.random.normal(kb, (cout,), jnp.float32)
    mean = 0.1 * jax.random.normal(km, (cout,), jnp.float32)
    var = 1.0 + 0.1 * jax.random.uniform(kv, (cout,), jnp.float32)
    scale = gamma / jnp.sqrt(var + BN_EPS)
    bias = beta - mean * scale
    return {"w": w.astype(jnp.bfloat16),                  # bf16 into the MXU
            "scale": scale.reshape(1, cout),              # f32 epilogue
            "bias": bias.reshape(1, cout)}


def _make_bottleneck(key, inplanes, planes, stride, dilation, with_downsample):
    k1, k2, k3, k4 = jax.random.split(key, 4)
    p = {
        "conv1": _make_conv_bn(k1, inplanes, planes, 1),
        "conv2": _make_conv_bn(k2, planes, planes, 3),
        "conv3": _make_conv_bn(k3, planes, planes * EXPANSION, 1),
        "stride": stride,
        "dilation": dilation,
    }
    if with_downsample:
        p["downsample"] = _make_conv_bn(k4, inplanes, planes * EXPANSION, 1)
    return p


def make_resnet_params(key, layers, num_classes):
    keys = jax.random.split(key, 8)
    params = {
        "conv1": _make_conv_bn(keys[0], 3, 64, 3),
        "conv2": _make_conv_bn(keys[1], 64, 64, 3),
        "conv3": _make_conv_bn(keys[2], 64, 128, 3),
    }
    inplanes = 128
    layer_cfg = [
        ("layer1", 64, layers[0], 1, 1),
        ("layer2", 128, layers[1], 2, 1),
        ("layer3", 256, layers[2], 2, 1),
        ("layer4", 512, layers[3], 1, 2),   # multi_grid=(1,1,1) -> dilation stays 2
    ]
    for idx, (name, planes, blocks, stride, dilation) in enumerate(layer_cfg):
        lkeys = jax.random.split(keys[3 + idx], blocks)
        blist = []
        for b in range(blocks):
            if b == 0:
                with_ds = (stride != 1) or (inplanes != planes * EXPANSION)
                blist.append(_make_bottleneck(lkeys[b], inplanes, planes,
                                              stride, dilation, with_ds))
                inplanes = planes * EXPANSION
            else:
                blist.append(_make_bottleneck(lkeys[b], inplanes, planes,
                                              1, dilation, False))
        params[name] = blist
    kfc_w, kfc_b = jax.random.split(keys[7], 2)
    d = 512 * EXPANSION
    params["fc_w"] = jax.random.normal(kfc_w, (d, num_classes), jnp.float32) / math.sqrt(d)
    params["fc_b"] = (0.01 * jax.random.normal(kfc_b, (num_classes,), jnp.float32)
                      ).reshape(1, num_classes)
    return params


# ---------------------------------------------------------------------------
# Forward pass (mirrors ResNet.forward with Bottleneck blocks, expansion=4)
# ---------------------------------------------------------------------------
def bottleneck_forward(x, p):
    if "downsample" in p:
        residual = conv_bn_act(x, p["downsample"], stride=p["stride"], relu=False)
    else:
        residual = x
    out = conv_bn_act(x, p["conv1"], relu=True)
    out = conv_bn_act(out, p["conv2"], stride=p["stride"],
                      dilation=p["dilation"], relu=True)
    # conv3 + BN + residual add + ReLU fused into a single GEMM epilogue.
    out = conv_bn_act(out, p["conv3"], relu=True, residual=residual)
    return out


def resnet_forward(x_nchw, params):
    x = jnp.transpose(x_nchw, (0, 2, 3, 1)).astype(jnp.bfloat16)  # NCHW -> NHWC bf16
    x = conv_bn_act(x, params["conv1"], stride=2, relu=True)
    x = conv_bn_act(x, params["conv2"], stride=1, relu=True)
    x = conv_bn_act(x, params["conv3"], stride=1, relu=True)
    x = maxpool3x3_s2p1(x)
    for name in ("layer1", "layer2", "layer3", "layer4"):
        for blk in params[name]:
            x = bottleneck_forward(x, blk)
    return avgpool7_fc(x, params["fc_w"], params["fc_b"])


# ---------------------------------------------------------------------------
if __name__ == "__main__":
    key = jax.random.PRNGKey(0)
    kx, kp = jax.random.split(key)

    # Small-but-valid shape: AvgPool2d(7) after the /16 downsampling path
    # requires a 112x112 input; batch=1, 3 channels, layers=[1,1,1,1], 10 classes.
    x = jax.random.normal(kx, (1, 3, 112, 112), jnp.float32)      # NCHW like PyTorch
    params = make_resnet_params(kp, layers=[1, 1, 1, 1], num_classes=10)

    logits = resnet_forward(x, params)
    logits = jax.block_until_ready(logits)
    assert logits.shape == (1, 10) and logits.dtype == jnp.float32
    print("KERNEL_OK")
</pallas_src>

<mosaic_0001>
module attributes {stable_mosaic.version = 11 : i64} {
  func.func @_gemm_bn_kernel(%arg0: i32, %arg1: i32, %arg2: i32, %arg3: memref<256x128xbf16, #tpu.memory_space<vmem>>, %arg4: memref<128x64xbf16, #tpu.memory_space<vmem>>, %arg5: memref<1x64xf32, #tpu.memory_space<vmem>>, %arg6: memref<1x64xf32, #tpu.memory_space<vmem>>, %arg7: memref<256x64xbf16, #tpu.memory_space<vmem>>, %arg8: memref<256x64xf32, #tpu.memory_space<vmem>>) attributes {dimension_semantics = [#tpu.dimension_semantics<parallel>, #tpu.dimension_semantics<parallel>, #tpu.dimension_semantics<arbitrary>], iteration_bounds = array<i64: 13, 1, 1>, scalar_prefetch = 0 : i64, scratch_operands = 1 : i64, tpu.core_type = #tpu.core_type<tc>, window_params = [{transform_indices = @transform_0, window_bounds = array<i64: 256, 128>}, {transform_indices = @transform_1, window_bounds = array<i64: 128, 64>}, {transform_indices = @transform_2, window_bounds = array<i64: 1, 64>}, {transform_indices = @transform_3, window_bounds = array<i64: 1, 64>}, {transform_indices = @transform_4, window_bounds = array<i64: 256, 64>}]} {
    %c0_i32 = arith.constant 0 : i32
    %0 = arith.cmpi eq, %arg2, %c0_i32 : i32
    %1 = arith.extui %0 : i1 to i32
    %c0_i32_0 = arith.constant 0 : i32
    %2 = arith.cmpi ne, %1, %c0_i32_0 : i32
    scf.if %2 {
      %cst_10 = arith.constant 0.000000e+00 : f32
      %12 = vector.broadcast %cst_10 : f32 to vector<256x64xf32>
      %c0_11 = arith.constant 0 : index
      %c0_12 = arith.constant 0 : index
      %13 = vector.load %arg8[%c0_11, %c0_12] : memref<256x64xf32, #tpu.memory_space<vmem>>, vector<256x64xf32>
      tpu.vector_store %arg8[%c0_11, %c0_12], %12 {strides = array<i32>} : memref<256x64xf32, #tpu.memory_space<vmem>>, vector<256x64xf32>,
    } else {
    }
    %c0 = arith.constant 0 : index
    %c0_1 = arith.constant 0 : index
    %3 = vector.load %arg8[%c0, %c0_1] : memref<256x64xf32, #tpu.memory_space<vmem>>, vector<256x64xf32>
    %c0_2 = arith.constant 0 : index
    %c0_3 = arith.constant 0 : index
    %4 = vector.load %arg3[%c0_2, %c0_3] : memref<256x128xbf16, #tpu.memory_space<vmem>>, vector<256x128xbf16>
    %c0_4 = arith.constant 0 : index
    %c0_5 = arith.constant 0 : index
    %5 = vector.load %arg4[%c0_4, %c0_5] : memref<128x64xbf16, #tpu.memory_space<vmem>>, vector<128x64xbf16>
    %cst = arith.constant dense<0.000000e+00> : vector<256x64xf32>
    %6 = tpu.matmul %4, %5, %cst {dimension_numbers = #tpu.dot_dimension_numbers<[1], [0], [0], [1], [0, 0, 1, 1], [], []>} : vector<256x128xbf16>, vector<128x64xbf16>, vector<256x64xf32> -> vector<256x64xf32>
    %7 = arith.addf %3, %6 : vector<256x64xf32>
    %c0_6 = arith.constant 0 : index
    %c0_7 = arith.constant 0 : index
    %8 = vector.load %arg8[%c0_6, %c0_7] : memref<256x64xf32, #tpu.memory_space<vmem>>, vector<256x64xf32>
    tpu.vector_store %arg8[%c0_6, %c0_7], %7 {strides = array<i32>} : memref<256x64xf32, #tpu.memory_space<vmem>>, vector<256x64xf32>,
    %c0_i32_8 = arith.constant 0 : i32
    %9 = arith.cmpi eq, %arg2, %c0_i32_8 : i32
    %10 = arith.extui %9 : i1 to i32
    %c0_i32_9 = arith.constant 0 : i32
    %11 = arith.cmpi ne, %10, %c0_i32_9 : i32
    scf.if %11 {
      %c0_10 = arith.constant 0 : index
      %c0_11 = arith.constant 0 : index
      %12 = vector.load %arg8[%c0_10, %c0_11] : memref<256x64xf32, #tpu.memory_space<vmem>>, vector<256x64xf32>
      %c0_12 = arith.constant 0 : index
      %c0_13 = arith.constant 0 : index
      %13 = vector.load %arg5[%c0_12, %c0_13] : memref<1x64xf32, #tpu.memory_space<vmem>>, vector<1x64xf32>
      %14 = vector.broadcast %13 : vector<1x64xf32> to vector<256x64xf32>
      %15 = arith.mulf %12, %14 : vector<256x64xf32>
      %c0_14 = arith.constant 0 : index
      %c0_15 = arith.constant 0 : index
      %16 = vector.load %arg6[%c0_14, %c0_15] : memref<1x64xf32, #tpu.memory_space<vmem>>, vector<1x64xf32>
      %17 = vector.broadcast %16 : vector<1x64xf32> to vector<256x64xf32>
      %18 = arith.addf %15, %17 : vector<256x64xf32>
      %cst_16 = arith.constant 0.000000e+00 : f32
      %19 = vector.broadcast %cst_16 : f32 to vector<256x64xf32>
      %20 = arith.maximumf %18, %19 : vector<256x64xf32>
      %21 = arith.truncf %20 : vector<256x64xf32> to vector<256x64xbf16>
      %c0_17 = arith.constant 0 : index
      %c0_18 = arith.constant 0 : index
      %22 = vector.load %arg7[%c0_17, %c0_18] : memref<256x64xbf16, #tpu.memory_space<vmem>>, vector<256x64xbf16>
      tpu.vector_store %arg7[%c0_17, %c0_18], %21 {strides = array<i32>} : memref<256x64xbf16, #tpu.memory_space<vmem>>, vector<256x64xbf16>,
    } else {
    }
    return
  }
  func.func @transform_0(%arg0: i32, %arg1: i32, %arg2: i32) -> (i32, i32) {
    %c0_i32 = arith.constant 0 : i32
    return %arg0, %arg2 : i32, i32
  }
  func.func @transform_1(%arg0: i32, %arg1: i32, %arg2: i32) -> (i32, i32) {
    %c0_i32 = arith.constant 0 : i32
    return %arg2, %arg1 : i32, i32
  }
  func.func @transform_2(%arg0: i32, %arg1: i32, %arg2: i32) -> (i32, i32) {
    %c0_i32 = arith.constant 0 : i32
    %c0_i32_0 = arith.constant 0 : i32
    return %c0_i32, %arg1 : i32, i32
  }
  func.func @transform_3(%arg0: i32, %arg1: i32, %arg2: i32) -> (i32, i32) {
    %c0_i32 = arith.constant 0 : i32
    %c0_i32_0 = arith.constant 0 : i32
    return %c0_i32, %arg1 : i32, i32
  }
  func.func @transform_4(%arg0: i32, %arg1: i32, %arg2: i32) -> (i32, i32) {
    %c0_i32 = arith.constant 0 : i32
    return %arg0, %arg1 : i32, i32
  }
}

</mosaic_0001>

<llo_original>
// kernel: tpu_custom_call.1
$region0: #{tpu_custom_call.1}
  #allocation0 [shape = 'u32[]', space=smem, size = 0x4, offset = 0x4, fixed_abs, tag = 'smem constant byte address 0x4 - core index']
  #allocation1 [shape = 'u32[144,128]{1,0:T(1,128)}', space=vmem, size = 0x12000, scoped, tag = 'internal scratch']
  #allocation2 [shape = 'f32[256,64]{1,0:T(8,128)}', space=vmem, size = 0x20000, scoped, tag = 'scratch operand']
  %s0 = inlined_call_operand.hbm [shape: bf16[3328,128], index: 0, kind: input, shape index: {}]
  %s1 = inlined_call_operand.vmem [shape: bf16[128,64], index: 1, kind: input, shape index: {}]
  %s2 = inlined_call_operand.vmem [shape: f32[1,64], index: 2, kind: input, shape index: {}]
  %s3 = inlined_call_operand.vmem [shape: f32[1,64], index: 3, kind: input, shape index: {}]
  %s4 = inlined_call_operand.vmem [shape: bf16[3328,64], index: 4, kind: output, shape index: {}]
  %s5 = sld [smem:[#allocation0]]
  $region61: #{tpu_custom_call.1} parent=0
    _
  %s7 = ssub.s32 1, %s5
  %s8 = scalar_select 0, %s7, %s5
  $region1: #{tpu_custom_call.1} parent=0
    #allocation3 [shape = 'u8[131072]{0}', space=vmem, size = 0x20000, scoped, tag = 'input window, operand 0']
    #allocation4 [shape = 's32[2]{0}', space=sflag, size = 0x8, scoped, tag = 'scoped memory for tpu_custom_call.1']
    %9 = vsyncpa [#allocation4], 0
    %s10 = scalar_lea.sflag [#allocation4], 1
    %11 = vsyncpa %s10, 0
    loop: start=0, step=1, limit=15
    $region2: #{tpu_custom_call.1} parent=1 // loop_pre_header
      _
    $region3: #{tpu_custom_call.1} parent=1 // loop_header
      %s13 = sphi 0, %s17
      %p14 = scmp.ge.s32.totalorder %s13, 15
      %s20 = sphi 0, %s39
      %s21 = sphi 0, %s35
      %s22 = sphi 0, %s31
      %s23 = sphi 0, %s20
      %s24 = sphi 0, %s21
      %s25 = sphi 0, %s22
      %s26 = sphi 0, %s23
      %s27 = sphi 0, %s24
      %s28 = sphi 0, %s25
      %s44 = sphi 0, %s46
      %s47 = sphi 0, %s44
      %s48 = sphi 0, %s47
      %s64 = sphi 0, %s48
      %s72 = sphi 0, %s74
      %s75 = sphi 0, %s72
      %s76 = sphi 0, %s75
      %s92 = sphi 0, %s76
      %s98 = sphi 0, %s100
      %s101 = sphi 0, %s98
      %s102 = sphi 0, %s101
      %s118 = sphi 0, %s102
      %s124 = sphi 0, %s126
      %s127 = sphi 0, %s124
      %s128 = sphi 0, %s127
      %s144 = sphi 0, %s128
      %s152 = sphi 0, %s154
      %s155 = sphi 0, %s152
      %s156 = sphi 0, %s155
      %s172 = sphi 0, %s156
    $region4: #{tpu_custom_call.1} parent=1 // loop_header_branch
      %16 = sbr.rel (%p14) target = $region8
    $region5: #{tpu_custom_call.1} parent=1 // loop_body
      %s18 = ssub.s32 %s13, 1
      %s19 = ssub.s32 %s13, 2
      %s29 = sadd.s32 1, %s22
      %p30 = scmp.ge.s32.totalorder %s29, 1
      %s31 = scalar_select %p30, 0, %s29
      %s32 = sadd.s32 1, %s21
      %s33 = scalar_select %p30, %s32, %s21
      %p34 = scmp.ge.s32.totalorder %s33, 1
      %s35 = scalar_select %p34, 0, %s33
      %s36 = sadd.s32 1, %s20
      %s37 = scalar_select %p34, %s36, %s20
      %p38 = scmp.ge.s32.totalorder %s37, 13
      %s39 = scalar_select %p38, 0, %s37
      %s40 = ssub.s32 %s20, %s39
      %s41 = ssub.s32 %s22, %s31
      %s42 = sor.u32 %s40, %s41
      %p43 = scmp.eq.s32.totalorder %s42, 0
      %s45 = sadd.s32 %s44, 1
      %s46 = scalar_select %p43, %s44, %s45
      %p49 = pneg %p43
      %p50 = scmp.eq.s32.totalorder %s13, 12
      %p51 = por %p49, %p50
      %p52 = scmp.ne.s32.totalorder %s44, %s47
      %p53 = scmp.eq.s32.totalorder %s13, 0
      %p54 = por %p52, %p53
      %p55 = scmp.ne.s32.totalorder %s44, %s47
      %p56 = scmp.eq.s32.totalorder %s18, 12
      %p57 = por %p55, %p56
      %p58 = scmp.ne.s32.totalorder %s47, %s48
      %p59 = scmp.eq.s32.totalorder %s18, 0
      %p60 = por %p58, %p59
      %p61 = scmp.ne.s32.totalorder %s47, %s48
      %p62 = scmp.eq.s32.totalorder %s19, 12
      %p63 = por %p61, %p62
      %p65 = scmp.ne.s32.totalorder %s48, %s64
      %p66 = scmp.eq.s32.totalorder %s19, 0
      %p67 = por %p65, %p66
      %s68 = ssub.s32 %s22, %s31
      %s69 = ssub.s32 %s21, %s35
      %s70 = sor.u32 %s68, %s69
      %p71 = scmp.eq.s32.totalorder %s70, 0
      %s73 = sadd.s32 %s72, 1
      %s74 = scalar_select %p71, %s72, %s73
      %p77 = pneg %p71
      %p78 = scmp.eq.s32.totalorder %s13, 12
      %p79 = por %p77, %p78
      %p80 = scmp.ne.s32.totalorder %s72, %s75
      %p81 = scmp.eq.s32.totalorder %s13, 0
      %p82 = por %p80, %p81
      %p83 = scmp.ne.s32.totalorder %s72, %s75
      %p84 = scmp.eq.s32.totalorder %s18, 12
      %p85 = por %p83, %p84
      %p86 = scmp.ne.s32.totalorder %s75, %s76
      %p87 = scmp.eq.s32.totalorder %s18, 0
      %p88 = por %p86, %p87
      %p89 = scmp.ne.s32.totalorder %s75, %s76
      %p90 = scmp.eq.s32.totalorder %s19, 12
      %p91 = por %p89, %p90
      %p93 = scmp.ne.s32.totalorder %s76, %s92
      %p94 = scmp.eq.s32.totalorder %s19, 0
      %p95 = por %p93, %p94
      %s96 = ssub.s32 %s21, %s35
      %p97 = scmp.eq.s32.totalorder %s96, 0
      %s99 = sadd.s32 %s98, 1
      %s100 = scalar_select %p97, %s98, %s99
      %p103 = pneg %p97
      %p104 = scmp.eq.s32.totalorder %s13, 12
      %p105 = por %p103, %p104
      %p106 = scmp.ne.s32.totalorder %s98, %s101
      %p107 = scmp.eq.s32.totalorder %s13, 0
      %p108 = por %p106, %p107
      %p109 = scmp.ne.s32.totalorder %s98, %s101
      %p110 = scmp.eq.s32.totalorder %s18, 12
      %p111 = por %p109, %p110
      %p112 = scmp.ne.s32.totalorder %s101, %s102
      %p113 = scmp.eq.s32.totalorder %s18, 0
      %p114 = por %p112, %p113
      %p115 = scmp.ne.s32.totalorder %s101, %s102
      %p116 = scmp.eq.s32.totalorder %s19, 12
      %p117 = por %p115, %p116
      %p119 = scmp.ne.s32.totalorder %s102, %s118
      %p120 = scmp.eq.s32.totalorder %s19, 0
      %p121 = por %p119, %p120
      %s122 = ssub.s32 %s21, %s35
      %p123 = scmp.eq.s32.totalorder %s122, 0
      %s125 = sadd.s32 %s124, 1
      %s126 = scalar_select %p123, %s124, %s125
      %p129 = pneg %p123
      %p130 = scmp.eq.s32.totalorder %s13, 12
      %p131 = por %p129, %p130
      %p132 = scmp.ne.s32.totalorder %s124, %s127
      %p133 = scmp.eq.s32.totalorder %s13, 0
      %p134 = por %p132, %p133
      %p135 = scmp.ne.s32.totalorder %s124, %s127
      %p136 = scmp.eq.s32.totalorder %s18, 12
      %p137 = por %p135, %p136
      %p138 = scmp.ne.s32.totalorder %s127, %s128
      %p139 = scmp.eq.s32.totalorder %s18, 0
      %p140 = por %p138, %p139
      %p141 = scmp.ne.s32.totalorder %s127, %s128
      %p142 = scmp.eq.s32.totalorder %s19, 12
      %p143 = por %p141, %p142
      %p145 = scmp.ne.s32.totalorder %s128, %s144
      %p146 = scmp.eq.s32.totalorder %s19, 0
      %p147 = por %p145, %p146
      %s148 = ssub.s32 %s20, %s39
      %s149 = ssub.s32 %s21, %s35
      %s150 = sor.u32 %s148, %s149
      %p151 = scmp.eq.s32.totalorder %s150, 0
      %s153 = sadd.s32 %s152, 1
      %s154 = scalar_select %p151, %s152, %s153
      %p157 = pneg %p151
      %p158 = scmp.eq.s32.totalorder %s13, 12
      %p159 = por %p157, %p158
      %p160 = scmp.ne.s32.totalorder %s152, %s155
      %p161 = scmp.eq.s32.totalorder %s13, 0
      %p162 = por %p160, %p161
      %p163 = scmp.ne.s32.totalorder %s152, %s155
      %p164 = scmp.eq.s32.totalorder %s18, 12
      %p165 = por %p163, %p164
      %p166 = scmp.ne.s32.totalorder %s155, %s156
      %p167 = scmp.eq.s32.totalorder %s18, 0
      %p168 = por %p166, %p167
      %p169 = scmp.ne.s32.totalorder %s155, %s156
      %p170 = scmp.eq.s32.totalorder %s19, 12
      %p171 = por %p169, %p170
      %p173 = scmp.ne.s32.totalorder %s156, %s172
      %p174 = scmp.eq.s32.totalorder %s19, 0
      %p175 = por %p173, %p174
      %p176 = scmp.le.s32.totalorder 1, %s13
      %p177 = scmp.lt.s32.totalorder %s13, 14
      %p178 = pnand %p176, %p177
      %p179 = pneg %p178
      // Predicated region
      $region9: #{tpu_custom_call.1} parent=5 // pred_check
        _
      $region10: #{tpu_custom_call.1} parent=5 // pred_check_branch
        %181 = sbr.rel (%p178) target = $region12
      $region11: #{tpu_custom_call.1} parent=5 // pred_region
        %s182 = ssub.s32 %s13, 1
        // Predicated region
        $region13: #{tpu_custom_call.1} parent=11 // pred_check
          %p183 = pneg %p88
        $region14: #{tpu_custom_call.1} parent=11 // pred_check_branch
          %185 = sbr.rel (%p183) target = $region16
        $region15: #{tpu_custom_call.1} parent=11 // pred_region
          %s186 = smul.u32 16, %s25
          %p187 = scmp.lt.s32.totalorder %s186, 15
          %s188 = scalar_select %p187, %s186, 15
          %p189 = scmp.lt.s32.totalorder %s24, 0
          %s190 = scalar_select %p189, %s24, 0
          %s191 = sadd.s32 %s190, %s188
          %s192 = smul.addr %s191, 4
          %s193 = scalar_lea.vmem %s1, %s192
          %s194 = smul.u32 16, %s25
        $region16: #{tpu_custom_call.1} parent=11 // pred_fallthru
          _
        // Predicated region
        $region17: #{tpu_custom_call.1} parent=11 // pred_check
          %p195 = pneg %p114
        $region18: #{tpu_custom_call.1} parent=11 // pred_check_branch
          %197 = sbr.rel (%p195) target = $region20
        $region19: #{tpu_custom_call.1} parent=11 // pred_region
          %p198 = scmp.lt.s32.totalorder %s24, 0
          %s199 = scalar_select %p198, %s24, 0
          %s200 = scalar_lea.vmem %s2, %s199
        $region20: #{tpu_custom_call.1} parent=11 // pred_fallthru
          _
        // Predicated region
        $region21: #{tpu_custom_call.1} parent=11 // pred_check
          %p201 = pneg %p140
        $region22: #{tpu_custom_call.1} parent=11 // pred_check_branch
          %203 = sbr.rel (%p201) target = $region24
        $region23: #{tpu_custom_call.1} parent=11 // pred_region
          %p204 = scmp.lt.s32.totalorder %s24, 0
          %s205 = scalar_select %p204, %s24, 0
          %s206 = scalar_lea.vmem %s3, %s205
        $region24: #{tpu_custom_call.1} parent=11 // pred_fallthru
          _
      $region12: #{tpu_custom_call.1} parent=5 // pred_fallthru
        _
      %p207 = scmp.lt.s32.totalorder %s13, 13
      // Predicated region
      $region25: #{tpu_custom_call.1} parent=5 // pred_check
        %p208 = pneg %p207
      $region26: #{tpu_custom_call.1} parent=5 // pred_check_branch
        %210 = sbr.rel (%p208) target = $region28
      $region27: #{tpu_custom_call.1} parent=5 // pred_region
        // Predicated region
        $region29: #{tpu_custom_call.1} parent=27 // pred_check
          %p211 = pneg %p54
        $region30: #{tpu_custom_call.1} parent=27 // pred_check_branch
          %213 = sbr.rel (%p211) target = $region32
        $region31: #{tpu_custom_call.1} parent=27 // pred_region
          %s214 = sand.u32 %s44, 1
          %s215 = scalar_lea.sflag [#allocation4], %s214
          %s216 = sand.u32 %s44, 1
          %s217 = smul.addr %s216, 128
          %s218 = scalar_lea.vmem [#allocation3], %s217
          %s219 = smul.u32 32, %s20
          %s221 = ssub.s32 2048, 2048
          %222 = vsyncadd %s215, %s221
          %s223 = sadd.s32 %s22, %s219
          %s224 = smul.addr %s223, 64
          %s225 = scalar_lea.hbm %s0, %s224
          %s226 = sshll.u32 %s218, 4
          %s227 = int_to_ptr.vmem [resolvable:$true] %s226
          %232 = dma.hbm_to_vmem [thread:$0]  %s225, 2048, %s227, %s215, 64, 64, 4
        $region32: #{tpu_custom_call.1} parent=27 // pred_fallthru
          _
      $region28: #{tpu_custom_call.1} parent=5 // pred_fallthru
        _
      %p233 = scmp.le.s32.totalorder 1, %s13
      %p234 = scmp.lt.s32.totalorder %s13, 14
      %p235 = pnand %p233, %p234
      %p236 = pneg %p235
      // Predicated region
      $region33: #{tpu_custom_call.1} parent=5 // pred_check
        _
      $region34: #{tpu_custom_call.1} parent=5 // pred_check_branch
        %238 = sbr.rel (%p235) target = $region36
      $region35: #{tpu_custom_call.1} parent=5 // pred_region
        %s239 = ssub.s32 %s13, 1
        %s240 = sand.u32 %s47, 1
        %s241 = scalar_lea.sflag [#allocation4], %s240
        %s242 = sand.u32 %s47, 1
        %s243 = smul.addr %s242, 128
        %s244 = scalar_lea.vmem [#allocation3], %s243
        // Predicated region
        $region37: #{tpu_custom_call.1} parent=35 // pred_check
          %p245 = pneg %p60
        $region38: #{tpu_custom_call.1} parent=35 // pred_check_branch
          %247 = sbr.rel (%p245) target = $region40
        $region39: #{tpu_custom_call.1} parent=35 // pred_region
          %248 = dma.done %s241, 2048
        $region40: #{tpu_custom_call.1} parent=35 // pred_fallthru
          _
        %s249 = sand.u32 %s47, 1
        %s250 = scalar_lea.sflag [#allocation4], %s249
        %s251 = sand.u32 %s47, 1
        %s252 = smul.addr %s251, 128
        %s253 = scalar_lea.vmem [#allocation3], %s252
        %p254 = pneg %p60
        %p255 = pneg %p57
        %s256 = smul.u32 16, %s25
        %p257 = scmp.lt.s32.totalorder %s256, 15
        %s258 = scalar_select %p257, %s256, 15
        %p259 = scmp.lt.s32.totalorder %s24, 0
        %s260 = scalar_select %p259, %s24, 0
        %s261 = sadd.s32 %s260, %s258
        %s262 = smul.addr %s261, 4
        %s263 = scalar_lea.vmem %s1, %s262
        %p264 = pneg %p88
        %p265 = pneg %p85
        %p266 = scmp.lt.s32.totalorder %s24, 0
        %s267 = scalar_select %p266, %s24, 0
        %s268 = scalar_lea.vmem %s2, %s267
        %p269 = pneg %p114
        %p270 = pneg %p111
        %p271 = scmp.lt.s32.totalorder %s24, 0
        %s272 = scalar_select %p271, %s24, 0
        %s273 = scalar_lea.vmem %s3, %s272
        %p274 = pneg %p140
        %p275 = pneg %p137
        %p276 = pneg %p168
        %p277 = pneg %p165
        %s278 = smul.u32 32, %s23
        %p279 = scmp.lt.s32.totalorder %s278, 415
        %s280 = scalar_select %p279, %s278, 415
        %p281 = scmp.lt.s32.totalorder %s24, 0
        %s282 = scalar_select %p281, %s24, 0
        %s283 = sadd.s32 %s282, %s280
        %s284 = smul.addr %s283, 4
        %s285 = scalar_lea.vmem %s4, %s284
        %s286 = smul.u32 32, %s23
        %s287 = smul.u32 16, %s25
        %p288 = scmp.lt.s32.totalorder %s287, 15
        %s289 = scalar_select %p288, %s287, 15
        %p290 = scmp.lt.s32.totalorder %s24, 0
        %s291 = scalar_select %p290, %s24, 0
        %s292 = sadd.s32 %s291, %s289
        %s293 = smul.addr %s292, 4
        %s294 = scalar_lea.vmem %s1, %s293
        %s295 = smul.u32 16, %s25
        %p296 = scmp.lt.s32.totalorder %s24, 0
        %s297 = scalar_select %p296, %s24, 0
        %s298 = scalar_lea.vmem %s2, %s297
        %p299 = scmp.lt.s32.totalorder %s24, 0
        %s300 = scalar_select %p299, %s24, 0
        %s301 = scalar_lea.vmem %s3, %s300
        %s302 = smul.u32 32, %s23
        %p303 = scmp.lt.s32.totalorder %s302, 415
        %s304 = scalar_select %p303, %s302, 415
        %p305 = scmp.lt.s32.totalorder %s24, 0
        %s306 = scalar_select %p305, %s24, 0
        %s307 = sadd.s32 %s306, %s304
        %s308 = smul.addr %s307, 4
        %s309 = scalar_lea.vmem %s4, %s308
        %s310 = smul.u32 32, %s23
        %p312 = scmp.eq.s32.totalorder %s25, 0
        // Predicated region
        $region41: #{tpu_custom_call.1} parent=35 // pred_check
          %p313 = pneg %p312
        $region42: #{tpu_custom_call.1} parent=35 // pred_check_branch
          %315 = sbr.rel (%p313) target = $region44
        $region43: #{tpu_custom_call.1} parent=35 // pred_region
          %vm316 = vcmask 523264
          %317 = vst.msk [vmem:[#allocation2] sm:$0xff] %vm316, 0.0
          %318 = vst.msk [vmem:[#allocation2 + $0x8] sm:$0xff] %vm316, 0.0
          %319 = vst.msk [vmem:[#allocation2 + $0x10] sm:$0xff] %vm316, 0.0
          %320 = vst.msk [vmem:[#allocation2 + $0x18] sm:$0xff] %vm316, 0.0
          %321 = vst.msk [vmem:[#allocation2 + $0x20] sm:$0xff] %vm316, 0.0
          %322 = vst.msk [vmem:[#allocation2 + $0x28] sm:$0xff] %vm316, 0.0
          %323 = vst.msk [vmem:[#allocation2 + $0x30] sm:$0xff] %vm316, 0.0
          %324 = vst.msk [vmem:[#allocation2 + $0x38] sm:$0xff] %vm316, 0.0
          %325 = vst.msk [vmem:[#allocation2 + $0x40] sm:$0xff] %vm316, 0.0
          %326 = vst.msk [vmem:[#allocation2 + $0x48] sm:$0xff] %vm316, 0.0
          %327 = vst.msk [vmem:[#allocation2 + $0x50] sm:$0xff] %vm316, 0.0
          %328 = vst.msk [vmem:[#allocation2 + $0x58] sm:$0xff] %vm316, 0.0
          %329 = vst.msk [vmem:[#allocation2 + $0x60] sm:$0xff] %vm316, 0.0
          %330 = vst.msk [vmem:[#allocation2 + $0x68] sm:$0xff] %vm316, 0.0
          %331 = vst.msk [vmem:[#allocation2 + $0x70] sm:$0xff] %vm316, 0.0
          %332 = vst.msk [vmem:[#allocation2 + $0x78] sm:$0xff] %vm316, 0.0
          %333 = vst.msk [vmem:[#allocation2 + $0x80] sm:$0xff] %vm316, 0.0
          %334 = vst.msk [vmem:[#allocation2 + $0x88] sm:$0xff] %vm316, 0.0
          %335 = vst.msk [vmem:[#allocation2 + $0x90] sm:$0xff] %vm316, 0.0
          %336 = vst.msk [vmem:[#allocation2 + $0x98] sm:$0xff] %vm316, 0.0
          %337 = vst.msk [vmem:[#allocation2 + $0xa0] sm:$0xff] %vm316, 0.0
          %338 = vst.msk [vmem:[#allocation2 + $0xa8] sm:$0xff] %vm316, 0.0
          %339 = vst.msk [vmem:[#allocation2 + $0xb0] sm:$0xff] %vm316, 0.0
          %340 = vst.msk [vmem:[#allocation2 + $0xb8] sm:$0xff] %vm316, 0.0
          %341 = vst.msk [vmem:[#allocation2 + $0xc0] sm:$0xff] %vm316, 0.0
          %342 = vst.msk [vmem:[#allocation2 + $0xc8] sm:$0xff] %vm316, 0.0
          %343 = vst.msk [vmem:[#allocation2 + $0xd0] sm:$0xff] %vm316, 0.0
          %344 = vst.msk [vmem:[#allocation2 + $0xd8] sm:$0xff] %vm316, 0.0
          %345 = vst.msk [vmem:[#allocation2 + $0xe0] sm:$0xff] %vm316, 0.0
          %346 = vst.msk [vmem:[#allocation2 + $0xe8] sm:$0xff] %vm316, 0.0
          %347 = vst.msk [vmem:[#allocation2 + $0xf0] sm:$0xff] %vm316, 0.0
          %348 = vst.msk [vmem:[#allocation2 + $0xf8] sm:$0xff] %vm316, 0.0
        $region44: #{tpu_custom_call.1} parent=35 // pred_fallthru
          _
        %v349 = vld [vmem:[#allocation2] sm:$0xff]
        %v350 = vld [vmem:[#allocation2 + $0x8] sm:$0xff]
        %v351 = vld [vmem:[#allocation2 + $0x10] sm:$0xff]
        %v352 = vld [vmem:[#allocation2 + $0x18] sm:$0xff]
        %v353 = vld [vmem:[#allocation2 + $0x20] sm:$0xff]
        %v354 = vld [vmem:[#allocation2 + $0x28] sm:$0xff]
        %v355 = vld [vmem:[#allocation2 + $0x30] sm:$0xff]
        %v356 = vld [vmem:[#allocation2 + $0x38] sm:$0xff]
        %v357 = vld [vmem:[#allocation2 + $0x40] sm:$0xff]
        %v358 = vld [vmem:[#allocation2 + $0x48] sm:$0xff]
        %v359 = vld [vmem:[#allocation2 + $0x50] sm:$0xff]
        %v360 = vld [vmem:[#allocation2 + $0x58] sm:$0xff]
        %v361 = vld [vmem:[#allocation2 + $0x60] sm:$0xff]
        %v362 = vld [vmem:[#allocation2 + $0x68] sm:$0xff]
        %v363 = vld [vmem:[#allocation2 + $0x70] sm:$0xff]
        %v364 = vld [vmem:[#allocation2 + $0x78] sm:$0xff]
        %v365 = vld [vmem:[#allocation2 + $0x80] sm:$0xff]
        %v366 = vld [vmem:[#allocation2 + $0x88] sm:$0xff]
        %v367 = vld [vmem:[#allocation2 + $0x90] sm:$0xff]
        %v368 = vld [vmem:[#allocation2 + $0x98] sm:$0xff]
        %v369 = vld [vmem:[#allocation2 + $0xa0] sm:$0xff]
        %v370 = vld [vmem:[#allocation2 + $0xa8] sm:$0xff]
        %v371 = vld [vmem:[#allocation2 + $0xb0] sm:$0xff]
        %v372 = vld [vmem:[#allocation2 + $0xb8] sm:$0xff]
        %v373 = vld [vmem:[#allocation2 + $0xc0] sm:$0xff]
        %v374 = vld [vmem:[#allocation2 + $0xc8] sm:$0xff]
        %v375 = vld [vmem:[#allocation2 + $0xd0] sm:$0xff]
        %v376 = vld [vmem:[#allocation2 + $0xd8] sm:$0xff]
        %v377 = vld [vmem:[#allocation2 + $0xe0] sm:$0xff]
        %v378 = vld [vmem:[#allocation2 + $0xe8] sm:$0xff]
        %v379 = vld [vmem:[#allocation2 + $0xf0] sm:$0xff]
        %v380 = vld [vmem:[#allocation2 + $0xf8] sm:$0xff]
        %v381 = vld [vmem:[%s244] sm:$0xf]
        %v382 = vld [vmem:[%s244 + $0x4] sm:$0xf]
        %v383 = vld [vmem:[%s244 + $0x8] sm:$0xf]
        %v384 = vld [vmem:[%s244 + $0xc] sm:$0xf]
        %v385 = vld [vmem:[%s244 + $0x10] sm:$0xf]
        %v386 = vld [vmem:[%s244 + $0x14] sm:$0xf]
        %v387 = vld [vmem:[%s244 + $0x18] sm:$0xf]
        %v388 = vld [vmem:[%s244 + $0x1c] sm:$0xf]
        %v389 = vld [vmem:[%s244 + $0x20] sm:$0xf]
        %v390 = vld [vmem:[%s244 + $0x24] sm:$0xf]
        %v391 = vld [vmem:[%s244 + $0x28] sm:$0xf]
        %v392 = vld [vmem:[%s244 + $0x2c] sm:$0xf]
        %v393 = vld [vmem:[%s244 + $0x30] sm:$0xf]
        %v394 = vld [vmem:[%s244 + $0x34] sm:$0xf]
        %v395 = vld [vmem:[%s244 + $0x38] sm:$0xf]
        %v396 = vld [vmem:[%s244 + $0x3c] sm:$0xf]
        %v397 = vld [vmem:[%s244 + $0x40] sm:$0xf]
        %v398 = vld [vmem:[%s244 + $0x44] sm:$0xf]
        %v399 = vld [vmem:[%s244 + $0x48] sm:$0xf]
        %v400 = vld [vmem:[%s244 + $0x4c] sm:$0xf]
        %v401 = vld [vmem:[%s244 + $0x50] sm:$0xf]
        %v402 = vld [vmem:[%s244 + $0x54] sm:$0xf]
        %v403 = vld [vmem:[%s244 + $0x58] sm:$0xf]
        %v404 = vld [vmem:[%s244 + $0x5c] sm:$0xf]
        %v405 = vld [vmem:[%s244 + $0x60] sm:$0xf]
        %v406 = vld [vmem:[%s244 + $0x64] sm:$0xf]
        %v407 = vld [vmem:[%s244 + $0x68] sm:$0xf]
        %v408 = vld [vmem:[%s244 + $0x6c] sm:$0xf]
        %v409 = vld [vmem:[%s244 + $0x70] sm:$0xf]
        %v410 = vld [vmem:[%s244 + $0x74] sm:$0xf]
        %v411 = vld [vmem:[%s244 + $0x78] sm:$0xf]
        %v412 = vld [vmem:[%s244 + $0x7c] sm:$0xf]
        %v413 = vld [vmem:[%s294] sm:$0xf]
        %v414 = vld [vmem:[%s294 + $0x4] sm:$0xf]
        %v415 = vld [vmem:[%s294 + $0x8] sm:$0xf]
        %v416 = vld [vmem:[%s294 + $0xc] sm:$0xf]
        %v417 = vld [vmem:[%s294 + $0x10] sm:$0xf]
        %v418 = vld [vmem:[%s294 + $0x14] sm:$0xf]
        %v419 = vld [vmem:[%s294 + $0x18] sm:$0xf]
        %v420 = vld [vmem:[%s294 + $0x1c] sm:$0xf]
        %v421 = vld [vmem:[%s294 + $0x20] sm:$0xf]
        %v422 = vld [vmem:[%s294 + $0x24] sm:$0xf]
        %v423 = vld [vmem:[%s294 + $0x28] sm:$0xf]
        %v424 = vld [vmem:[%s294 + $0x2c] sm:$0xf]
        %v425 = vld [vmem:[%s294 + $0x30] sm:$0xf]
        %v426 = vld [vmem:[%s294 + $0x34] sm:$0xf]
        %v427 = vld [vmem:[%s294 + $0x38] sm:$0xf]
        %v428 = vld [vmem:[%s294 + $0x3c] sm:$0xf]
        %v461 = vunpack.c.l.b16 %v381
        %v462 = vunpack.c.l.b16 %v382
        %v463 = vunpack.c.l.b16 %v383
        %v464 = vunpack.c.l.b16 %v384
        %v465 = vunpack.c.l.b16 %v385
        %v466 = vunpack.c.l.b16 %v386
        %v467 = vunpack.c.l.b16 %v387
        %v468 = vunpack.c.l.b16 %v388
        %v469 = vunpack.c.l.b16 %v389
        %v470 = vunpack.c.l.b16 %v390
        %v471 = vunpack.c.l.b16 %v391
        %v472 = vunpack.c.l.b16 %v392
        %v473 = vunpack.c.l.b16 %v393
        %v474 = vunpack.c.l.b16 %v394
        %v475 = vunpack.c.l.b16 %v395
        %v476 = vunpack.c.l.b16 %v396
        %v477 = vunpack.c.l.b16 %v397
        %v478 = vunpack.c.l.b16 %v398
        %v479 = vunpack.c.l.b16 %v399
        %v480 = vunpack.c.l.b16 %v400
        %v481 = vunpack.c.l.b16 %v401
        %v482 = vunpack.c.l.b16 %v402
        %v483 = vunpack.c.l.b16 %v403
        %v484 = vunpack.c.l.b16 %v404
        %v485 = vunpack.c.l.b16 %v405
        %v486 = vunpack.c.l.b16 %v406
        %v487 = vunpack.c.l.b16 %v407
        %v488 = vunpack.c.l.b16 %v408
        %v489 = vunpack.c.l.b16 %v409
        %v490 = vunpack.c.l.b16 %v410
        %v491 = vunpack.c.l.b16 %v411
        %v492 = vunpack.c.l.b16 %v412
        %v493 = vpack.c.b16 %v462, %v461
        %v494 = vpack.c.b16 %v464, %v463
        %v495 = vpack.c.b16 %v466, %v465
        %v496 = vpack.c.b16 %v468, %v467
        %v497 = vpack.c.b16 %v470, %v469
        %v498 = vpack.c.b16 %v472, %v471
        %v499 = vpack.c.b16 %v474, %v473
        %v500 = vpack.c.b16 %v476, %v475
        %v501 = vpack.c.b16 %v478, %v477
        %v502 = vpack.c.b16 %v480, %v479
        %v503 = vpack.c.b16 %v482, %v481
        %v504 = vpack.c.b16 %v484, %v483
        %v505 = vpack.c.b16 %v486, %v485
        %v506 = vpack.c.b16 %v488, %v487
        %v507 = vpack.c.b16 %v490, %v489
        %v508 = vpack.c.b16 %v492, %v491
        %v541 = vunpack.c.l.b16 %v413
        %v542 = vunpack.c.l.b16 %v414
        %v543 = vunpack.c.l.b16 %v415
        %v544 = vunpack.c.l.b16 %v416
        %v545 = vunpack.c.l.b16 %v417
        %v546 = vunpack.c.l.b16 %v418
        %v547 = vunpack.c.l.b16 %v419
        %v548 = vunpack.c.l.b16 %v420
        %v549 = vunpack.c.l.b16 %v421
        %v550 = vunpack.c.l.b16 %v422
        %v551 = vunpack.c.l.b16 %v423
        %v552 = vunpack.c.l.b16 %v424
        %v553 = vunpack.c.l.b16 %v425
        %v554 = vunpack.c.l.b16 %v426
        %v555 = vunpack.c.l.b16 %v427
        %v556 = vunpack.c.l.b16 %v428
        %v557 = vpack.c.b16 %v542, %v541
        %v558 = vpack.c.b16 %v544, %v543
        %v559 = vpack.c.b16 %v546, %v545
        %v560 = vpack.c.b16 %v548, %v547
        %v561 = vpack.c.b16 %v550, %v549
        %v562 = vpack.c.b16 %v552, %v551
        %v563 = vpack.c.b16 %v554, %v553
        %v564 = vpack.c.b16 %v556, %v555
        %573 = vmatprep.subr.bf16.mxu0 0
        %574 = vmatpush1.bf16.msra.mxu0 %v557
        %575 = vmatprep.subr.bf16.mxu0 0
        %576 = vmatpush1.bf16.msra.mxu0 %v558
        %577 = vmatprep.subr.bf16.mxu0 0
        %578 = vmatpush1.bf16.msra.mxu0 %v559
        %579 = vmatprep.subr.bf16.mxu0 0
        %580 = vmatpush1.bf16.msra.mxu0 %v560
        %581 = vmatprep.subr.bf16.mxu0 0
        %582 = vmatpush1.bf16.msra.mxu0 %v561
        %583 = vmatprep.subr.bf16.mxu0 0
        %584 = vmatpush1.bf16.msra.mxu0 %v562
        %585 = vmatprep.subr.bf16.mxu0 0
        %586 = vmatpush1.bf16.msra.mxu0 %v563
        %587 = vmatprep.subr.bf16.mxu0 0
        %588 = vmatpush1.bf16.msra.mxu0 %v564
        %589 = vmatprep.subr.bf16.mxu0 0
        %590 = vmatpush1.bf16.msra.mxu0 0
        %591 = vmatprep.subr.bf16.mxu0 0
        %592 = vmatpush1.bf16.msra.mxu0 0
        %593 = vmatprep.subr.bf16.mxu0 0
        %594 = vmatpush1.bf16.msra.mxu0 0
        %595 = vmatprep.subr.bf16.mxu0 0
        %596 = vmatpush1.bf16.msra.mxu0 0
        %597 = vmatprep.subr.bf16.mxu0 0
        %598 = vmatpush1.bf16.msra.mxu0 0
        %599 = vmatprep.subr.bf16.mxu0 0
        %600 = vmatpush1.bf16.msra.mxu0 0
        %601 = vmatprep.subr.bf16.mxu0 0
        %602 = vmatpush1.bf16.msra.mxu0 0
        %603 = vmatprep.subr.bf16.mxu0 0
        %604 = vmatpush1.bf16.msra.mxu0 0
        %605 = vmatprep.mubr.bf16.mxu0 0
        %606 = vmatmul.mubr.bf16.gmra.mrb[0].mxu0 %v493
        %v607 = vpop.f32.mrb[0].mxu0
        %v608 = vadd.f32 0.0, %v607
        %v609 = vpop.f32.mrb[0].mxu0
        %v610 = vpop.f32.mrb[0].mxu0
        %v611 = vadd.f32 0.0, %v610
        %v612 = vpop.f32.mrb[0].mxu0
        %613 = vmatprep.mubr.bf16.mxu0 0
        %614 = vmatmul.mubr.bf16.gmra.mrb[0].mxu0 %v494
        %v615 = vpop.f32.mrb[0].mxu0
        %v616 = vadd.f32 0.0, %v615
        %v617 = vpop.f32.mrb[0].mxu0
        %v618 = vpop.f32.mrb[0].mxu0
        %v619 = vadd.f32 0.0, %v618
        %v620 = vpop.f32.mrb[0].mxu0
        %621 = vmatprep.mubr.bf16.mxu0 0
        %622 = vmatmul.mubr.bf16.gmra.mrb[0].mxu0 %v495
        %v623 = vpop.f32.mrb[0].mxu0
        %v624 = vadd.f32 0.0, %v623
        %v625 = vpop.f32.mrb[0].mxu0
        %v626 = vpop.f32.mrb[0].mxu0
        %v627 = vadd.f32 0.0, %v626
        %v628 = vpop.f32.mrb[0].mxu0
        %629 = vmatprep.mubr.bf16.mxu0 0
        %630 = vmatmul.mubr.bf16.gmra.mrb[0].mxu0 %v496
        %v631 = vpop.f32.mrb[0].mxu0
        %v632 = vadd.f32 0.0, %v631
        %v633 = vpop.f32.mrb[0].mxu0
        %v634 = vpop.f32.mrb[0].mxu0
        %v635 = vadd.f32 0.0, %v634
        %v636 = vpop.f32.mrb[0].mxu0
        %637 = vmatprep.mubr.bf16.mxu0 0
        %638 = vmatmul.mubr.bf16.gmra.mrb[0].mxu0 %v497
        %v639 = vpop.f32.mrb[0].mxu0
        %v640 = vadd.f32 0.0, %v639
        %v641 = vpop.f32.mrb[0].mxu0
        %v642 = vpop.f32.mrb[0].mxu0
        %v643 = vadd.f32 0.0, %v642
        %v644 = vpop.f32.mrb[0].mxu0
        %645 = vmatprep.mubr.bf16.mxu0 0
        %646 = vmatmul.mubr.bf16.gmra.mrb[0].mxu0 %v498
        %v647 = vpop.f32.mrb[0].mxu0
        %v648 = vadd.f32 0.0, %v647
        %v649 = vpop.f32.mrb[0].mxu0
        %v650 = vpop.f32.mrb[0].mxu0
        %v651 = vadd.f32 0.0, %v650
        %v652 = vpop.f32.mrb[0].mxu0
        %653 = vmatprep.mubr.bf16.mxu0 0
        %654 = vmatmul.mubr.bf16.gmra.mrb[0].mxu0 %v499
        %v655 = vpop.f32.mrb[0].mxu0
        %v656 = vadd.f32 0.0, %v655
        %v657 = vpop.f32.mrb[0].mxu0
        %v658 = vpop.f32.mrb[0].mxu0
        %v659 = vadd.f32 0.0, %v658
        %v660 = vpop.f32.mrb[0].mxu0
        %661 = vmatprep.mubr.bf16.mxu0 0
        %662 = vmatmul.mubr.bf16.gmra.mrb[0].mxu0 %v500
        %v663 = vpop.f32.mrb[0].mxu0
        %v664 = vadd.f32 0.0, %v663
        %v665 = vpop.f32.mrb[0].mxu0
        %v666 = vpop.f32.mrb[0].mxu0
        %v667 = vadd.f32 0.0, %v666
        %v668 = vpop.f32.mrb[0].mxu0
        %669 = vmatprep.mubr.bf16.mxu0 0
        %670 = vmatmul.mubr.bf16.gmra.mrb[0].mxu0 %v501
        %v671 = vpop.f32.mrb[0].mxu0
        %v672 = vadd.f32 0.0, %v671
        %v673 = vpop.f32.mrb[0].mxu0
        %v674 = vpop.f32.mrb[0].mxu0
        %v675 = vadd.f32 0.0, %v674
        %v676 = vpop.f32.mrb[0].mxu0
        %677 = vmatprep.mubr.bf16.mxu0 0
        %678 = vmatmul.mubr.bf16.gmra.mrb[0].mxu0 %v502
        %v679 = vpop.f32.mrb[0].mxu0
        %v680 = vadd.f32 0.0, %v679
        %v681 = vpop.f32.mrb[0].mxu0
        %v682 = vpop.f32.mrb[0].mxu0
        %v683 = vadd.f32 0.0, %v682
        %v684 = vpop.f32.mrb[0].mxu0
        %685 = vmatprep.mubr.bf16.mxu0 0
        %686 = vmatmul.mubr.bf16.gmra.mrb[0].mxu0 %v503
        %v687 = vpop.f32.mrb[0].mxu0
        %v688 = vadd.f32 0.0, %v687
        %v689 = vpop.f32.mrb[0].mxu0
        %v690 = vpop.f32.mrb[0].mxu0
        %v691 = vadd.f32 0.0, %v690
        %v692 = vpop.f32.mrb[0].mxu0
        %693 = vmatprep.mubr.bf16.mxu0 0
        %694 = vmatmul.mubr.bf16.gmra.mrb[0].mxu0 %v504
        %v695 = vpop.f32.mrb[0].mxu0
        %v696 = vadd.f32 0.0, %v695
        %v697 = vpop.f32.mrb[0].mxu0
        %v698 = vpop.f32.mrb[0].mxu0
        %v699 = vadd.f32 0.0, %v698
        %v700 = vpop.f32.mrb[0].mxu0
        %701 = vmatprep.mubr.bf16.mxu0 0
        %702 = vmatmul.mubr.bf16.gmra.mrb[0].mxu0 %v505
        %v703 = vpop.f32.mrb[0].mxu0
        %v704 = vadd.f32 0.0, %v703
        %v705 = vpop.f32.mrb[0].mxu0
        %v706 = vpop.f32.mrb[0].mxu0
        %v707 = vadd.f32 0.0, %v706
        %v708 = vpop.f32.mrb[0].mxu0
        %709 = vmatprep.mubr.bf16.mxu0 0
        %710 = vmatmul.mubr.bf16.gmra.mrb[0].mxu0 %v506
        %v711 = vpop.f32.mrb[0].mxu0
        %v712 = vadd.f32 0.0, %v711
        %v713 = vpop.f32.mrb[0].mxu0
        %v714 = vpop.f32.mrb[0].mxu0
        %v715 = vadd.f32 0.0, %v714
        %v716 = vpop.f32.mrb[0].mxu0
        %717 = vmatprep.mubr.bf16.mxu0 0
        %718 = vmatmul.mubr.bf16.gmra.mrb[0].mxu0 %v507
        %v719 = vpop.f32.mrb[0].mxu0
        %v720 = vadd.f32 0.0, %v719
        %v721 = vpop.f32.mrb[0].mxu0
        %v722 = vpop.f32.mrb[0].mxu0
        %v723 = vadd.f32 0.0, %v722
        %v724 = vpop.f32.mrb[0].mxu0
        %725 = vmatprep.mubr.bf16.mxu0 0
        %726 = vmatmul.mubr.bf16.gmra.mrb[0].mxu0 %v508
        %v727 = vpop.f32.mrb[0].mxu0
        %v728 = vadd.f32 0.0, %v727
        %v729 = vpop.f32.mrb[0].mxu0
        %v730 = vpop.f32.mrb[0].mxu0
        %v731 = vadd.f32 0.0, %v730
        %v732 = vpop.f32.mrb[0].mxu0
        %733 = vdwg.mxu0
        %v734 = vadd.f32 %v349, %v608
        %v735 = vadd.f32 %v350, %v611
        %v736 = vadd.f32 %v351, %v616
        %v737 = vadd.f32 %v352, %v619
        %v738 = vadd.f32 %v353, %v624
        %v739 = vadd.f32 %v354, %v627
        %v740 = vadd.f32 %v355, %v632
        %v741 = vadd.f32 %v356, %v635
        %v742 = vadd.f32 %v357, %v640
        %v743 = vadd.f32 %v358, %v643
        %v744 = vadd.f32 %v359, %v648
        %v745 = vadd.f32 %v360, %v651
        %v746 = vadd.f32 %v361, %v656
        %v747 = vadd.f32 %v362, %v659
        %v748 = vadd.f32 %v363, %v664
        %v749 = vadd.f32 %v364, %v667
        %v750 = vadd.f32 %v365, %v672
        %v751 = vadd.f32 %v366, %v675
        %v752 = vadd.f32 %v367, %v680
        %v753 = vadd.f32 %v368, %v683
        %v754 = vadd.f32 %v369, %v688
        %v755 = vadd.f32 %v370, %v691
        %v756 = vadd.f32 %v371, %v696
        %v757 = vadd.f32 %v372, %v699
        %v758 = vadd.f32 %v373, %v704
        %v759 = vadd.f32 %v374, %v707
        %v760 = vadd.f32 %v375, %v712
        %v761 = vadd.f32 %v376, %v715
        %v762 = vadd.f32 %v377, %v720
        %v763 = vadd.f32 %v378, %v723
        %v764 = vadd.f32 %v379, %v728
        %v765 = vadd.f32 %v380, %v731
        %vm766 = vcmask 523264
        %767 = vst.msk [vmem:[#allocation2] sm:$0xff] %vm766, %v734
        %768 = vst.msk [vmem:[#allocation2 + $0x8] sm:$0xff] %vm766, %v735
        %769 = vst.msk [vmem:[#allocation2 + $0x10] sm:$0xff] %vm766, %v736
        %770 = vst.msk [vmem:[#allocation2 + $0x18] sm:$0xff] %vm766, %v737
        %771 = vst.msk [vmem:[#allocation2 + $0x20] sm:$0xff] %vm766, %v738
        %772 = vst.msk [vmem:[#allocation2 + $0x28] sm:$0xff] %vm766, %v739
        %773 = vst.msk [vmem:[#allocation2 + $0x30] sm:$0xff] %vm766, %v740
        %774 = vst.msk [vmem:[#allocation2 + $0x38] sm:$0xff] %vm766, %v741
        %775 = vst.msk [vmem:[#allocation2 + $0x40] sm:$0xff] %vm766, %v742
        %776 = vst.msk [vmem:[#allocation2 + $0x48] sm:$0xff] %vm766, %v743
        %777 = vst.msk [vmem:[#allocation2 + $0x50] sm:$0xff] %vm766, %v744
        %778 = vst.msk [vmem:[#allocation2 + $0x58] sm:$0xff] %vm766, %v745
        %779 = vst.msk [vmem:[#allocation2 + $0x60] sm:$0xff] %vm766, %v746
        %780 = vst.msk [vmem:[#allocation2 + $0x68] sm:$0xff] %vm766, %v747
        %781 = vst.msk [vmem:[#allocation2 + $0x70] sm:$0xff] %vm766, %v748
        %782 = vst.msk [vmem:[#allocation2 + $0x78] sm:$0xff] %vm766, %v749
        %783 = vst.msk [vmem:[#allocation2 + $0x80] sm:$0xff] %vm766, %v750
        %784 = vst.msk [vmem:[#allocation2 + $0x88] sm:$0xff] %vm766, %v751
        %785 = vst.msk [vmem:[#allocation2 + $0x90] sm:$0xff] %vm766, %v752
        %786 = vst.msk [vmem:[#allocation2 + $0x98] sm:$0xff] %vm766, %v753
        %787 = vst.msk [vmem:[#allocation2 + $0xa0] sm:$0xff] %vm766, %v754
        %788 = vst.msk [vmem:[#allocation2 + $0xa8] sm:$0xff] %vm766, %v755
        %789 = vst.msk [vmem:[#allocation2 + $0xb0] sm:$0xff] %vm766, %v756
        %790 = vst.msk [vmem:[#allocation2 + $0xb8] sm:$0xff] %vm766, %v757
        %791 = vst.msk [vmem:[#allocation2 + $0xc0] sm:$0xff] %vm766, %v758
        %792 = vst.msk [vmem:[#allocation2 + $0xc8] sm:$0xff] %vm766, %v759
        %793 = vst.msk [vmem:[#allocation2 + $0xd0] sm:$0xff] %vm766, %v760
        %794 = vst.msk [vmem:[#allocation2 + $0xd8] sm:$0xff] %vm766, %v761
        %795 = vst.msk [vmem:[#allocation2 + $0xe0] sm:$0xff] %vm766, %v762
        %796 = vst.msk [vmem:[#allocation2 + $0xe8] sm:$0xff] %vm766, %v763
        %797 = vst.msk [vmem:[#allocation2 + $0xf0] sm:$0xff] %vm766, %v764
        %798 = vst.msk [vmem:[#allocation2 + $0xf8] sm:$0xff] %vm766, %v765
        // Predicated region
        $region45: #{tpu_custom_call.1} parent=35 // pred_check
          %p799 = pneg %p312
        $region46: #{tpu_custom_call.1} parent=35 // pred_check_branch
          %801 = sbr.rel (%p799) target = $region48
        $region47: #{tpu_custom_call.1} parent=35 // pred_region
          %v802 = vld [vmem:[#allocation2] sm:$0xff]
          %v803 = vld [vmem:[#allocation2 + $0x8] sm:$0xff]
          %v804 = vld [vmem:[#allocation2 + $0x10] sm:$0xff]
          %v805 = vld [vmem:[#allocation2 + $0x18] sm:$0xff]
          %v806 = vld [vmem:[#allocation2 + $0x20] sm:$0xff]
          %v807 = vld [vmem:[#allocation2 + $0x28] sm:$0xff]
          %v808 = vld [vmem:[#allocation2 + $0x30] sm:$0xff]
          %v809 = vld [vmem:[#allocation2 + $0x38] sm:$0xff]
          %v810 = vld [vmem:[#allocation2 + $0x40] sm:$0xff]
          %v811 = vld [vmem:[#allocation2 + $0x48] sm:$0xff]
          %v812 = vld [vmem:[#allocation2 + $0x50] sm:$0xff]
          %v813 = vld [vmem:[#allocation2 + $0x58] sm:$0xff]
          %v814 = vld [vmem:[#allocation2 + $0x60] sm:$0xff]
          %v815 = vld [vmem:[#allocation2 + $0x68] sm:$0xff]
          %v816 = vld [vmem:[#allocation2 + $0x70] sm:$0xff]
          %v817 = vld [vmem:[#allocation2 + $0x78] sm:$0xff]
          %v818 = vld [vmem:[#allocation2 + $0x80] sm:$0xff]
          %v819 = vld [vmem:[#allocation2 + $0x88] sm:$0xff]
          %v820 = vld [vmem:[#allocation2 + $0x90] sm:$0xff]
          %v821 = vld [vmem:[#allocation2 + $0x98] sm:$0xff]
          %v822 = vld [vmem:[#allocation2 + $0xa0] sm:$0xff]
          %v823 = vld [vmem:[#allocation2 + $0xa8] sm:$0xff]
          %v824 = vld [vmem:[#allocation2 + $0xb0] sm:$0xff]
          %v825 = vld [vmem:[#allocation2 + $0xb8] sm:$0xff]
          %v826 = vld [vmem:[#allocation2 + $0xc0] sm:$0xff]
          %v827 = vld [vmem:[#allocation2 + $0xc8] sm:$0xff]
          %v828 = vld [vmem:[#allocation2 + $0xd0] sm:$0xff]
          %v829 = vld [vmem:[#allocation2 + $0xd8] sm:$0xff]
          %v830 = vld [vmem:[#allocation2 + $0xe0] sm:$0xff]
          %v831 = vld [vmem:[#allocation2 + $0xe8] sm:$0xff]
          %v832 = vld [vmem:[#allocation2 + $0xf0] sm:$0xff]
          %v833 = vld [vmem:[#allocation2 + $0xf8] sm:$0xff]
          %v834 = vld [vmem:[%s298] sm:$0x1]
          %v836 = vlaneseq
          %v837 = vshrl.u32 %v836, 7
          %v838 = vsub.s32 0, %v837
          %v839 = vrot.slane %v834, %v838
          %v841 = vmul.f32 %v802, %v839
          %v842 = vmul.f32 %v803, %v839
          %v843 = vmul.f32 %v804, %v839
          %v844 = vmul.f32 %v805, %v839
          %v845 = vmul.f32 %v806, %v839
          %v846 = vmul.f32 %v807, %v839
          %v847 = vmul.f32 %v808, %v839
          %v848 = vmul.f32 %v809, %v839
          %v849 = vmul.f32 %v810, %v839
          %v850 = vmul.f32 %v811, %v839
          %v851 = vmul.f32 %v812, %v839
          %v852 = vmul.f32 %v813, %v839
          %v853 = vmul.f32 %v814, %v839
          %v854 = vmul.f32 %v815, %v839
          %v855 = vmul.f32 %v816, %v839
          %v856 = vmul.f32 %v817, %v839
          %v857 = vmul.f32 %v818, %v839
          %v858 = vmul.f32 %v819, %v839
          %v859 = vmul.f32 %v820, %v839
          %v860 = vmul.f32 %v821, %v839
          %v861 = vmul.f32 %v822, %v839
          %v862 = vmul.f32 %v823, %v839
          %v863 = vmul.f32 %v824, %v839
          %v864 = vmul.f32 %v825, %v839
          %v865 = vmul.f32 %v826, %v839
          %v866 = vmul.f32 %v827, %v839
          %v867 = vmul.f32 %v828, %v839
          %v868 = vmul.f32 %v829, %v839
          %v869 = vmul.f32 %v830, %v839
          %v870 = vmul.f32 %v831, %v839
          %v871 = vmul.f32 %v832, %v839
          %v872 = vmul.f32 %v833, %v839
          %v873 = vld [vmem:[%s301] sm:$0x1]
          %v875 = vlaneseq
          %v876 = vshrl.u32 %v875, 7
          %v877 = vsub.s32 0, %v876
          %v878 = vrot.slane %v873, %v877
          %v880 = vadd.f32 %v841, %v878
          %v881 = vadd.f32 %v842, %v878
          %v882 = vadd.f32 %v843, %v878
          %v883 = vadd.f32 %v844, %v878
          %v884 = vadd.f32 %v845, %v878
          %v885 = vadd.f32 %v846, %v878
          %v886 = vadd.f32 %v847, %v878
          %v887 = vadd.f32 %v848, %v878
          %v888 = vadd.f32 %v849, %v878
          %v889 = vadd.f32 %v850, %v878
          %v890 = vadd.f32 %v851, %v878
          %v891 = vadd.f32 %v852, %v878
          %v892 = vadd.f32 %v853, %v878
          %v893 = vadd.f32 %v854, %v878
          %v894 = vadd.f32 %v855, %v878
          %v895 = vadd.f32 %v856, %v878
          %v896 = vadd.f32 %v857, %v878
          %v897 = vadd.f32 %v858, %v878
          %v898 = vadd.f32 %v859, %v878
          %v899 = vadd.f32 %v860, %v878
          %v900 = vadd.f32 %v861, %v878
          %v901 = vadd.f32 %v862, %v878
          %v902 = vadd.f32 %v863, %v878
          %v903 = vadd.f32 %v864, %v878
          %v904 = vadd.f32 %v865, %v878
          %v905 = vadd.f32 %v866, %v878
          %v906 = vadd.f32 %v867, %v878
          %v907 = vadd.f32 %v868, %v878
          %v908 = vadd.f32 %v869, %v878
          %v909 = vadd.f32 %v870, %v878
          %v910 = vadd.f32 %v871, %v878
          %v911 = vadd.f32 %v872, %v878
          %v912 = vmax.f32 %v880, 0.0
          %v913 = vmax.f32 %v881, 0.0
          %v914 = vmax.f32 %v882, 0.0
          %v915 = vmax.f32 %v883, 0.0
          %v916 = vmax.f32 %v884, 0.0
          %v917 = vmax.f32 %v885, 0.0
          %v918 = vmax.f32 %v886, 0.0
          %v919 = vmax.f32 %v887, 0.0
          %v920 = vmax.f32 %v888, 0.0
          %v921 = vmax.f32 %v889, 0.0
          %v922 = vmax.f32 %v890, 0.0
          %v923 = vmax.f32 %v891, 0.0
          %v924 = vmax.f32 %v892, 0.0
          %v925 = vmax.f32 %v893, 0.0
          %v926 = vmax.f32 %v894, 0.0
          %v927 = vmax.f32 %v895, 0.0
          %v928 = vmax.f32 %v896, 0.0
          %v929 = vmax.f32 %v897, 0.0
          %v930 = vmax.f32 %v898, 0.0
          %v931 = vmax.f32 %v899, 0.0
          %v932 = vmax.f32 %v900, 0.0
          %v933 = vmax.f32 %v901, 0.0
          %v934 = vmax.f32 %v902, 0.0
          %v935 = vmax.f32 %v903, 0.0
          %v936 = vmax.f32 %v904, 0.0
          %v937 = vmax.f32 %v905, 0.0
          %v938 = vmax.f32 %v906, 0.0
          %v939 = vmax.f32 %v907, 0.0
          %v940 = vmax.f32 %v908, 0.0
          %v941 = vmax.f32 %v909, 0.0
          %v942 = vmax.f32 %v910, 0.0
          %v943 = vmax.f32 %v911, 0.0
          %v944 = vpack.c.bf16 %v913, %v912
          %v945 = vpack.c.bf16 %v915, %v914
          %v946 = vpack.c.bf16 %v917, %v916
          %v947 = vpack.c.bf16 %v919, %v918
          %v948 = vpack.c.bf16 %v921, %v920
          %v949 = vpack.c.bf16 %v923, %v922
          %v950 = vpack.c.bf16 %v925, %v924
          %v951 = vpack.c.bf16 %v927, %v926
          %v952 = vpack.c.bf16 %v929, %v928
          %v953 = vpack.c.bf16 %v931, %v930
          %v954 = vpack.c.bf16 %v933, %v932
          %v955 = vpack.c.bf16 %v935, %v934
          %v956 = vpack.c.bf16 %v937, %v936
          %v957 = vpack.c.bf16 %v939, %v938
          %v958 = vpack.c.bf16 %v941, %v940
          %v959 = vpack.c.bf16 %v943, %v942
          %v976 = vunpack.c.l.b16 %v944
          %v977 = vunpack.c.h.b16 %v944
          %v978 = vunpack.c.l.b16 %v945
          %v979 = vunpack.c.h.b16 %v945
          %v980 = vunpack.c.l.b16 %v946
          %v981 = vunpack.c.h.b16 %v946
          %v982 = vunpack.c.l.b16 %v947
          %v983 = vunpack.c.h.b16 %v947
          %v984 = vunpack.c.l.b16 %v948
          %v985 = vunpack.c.h.b16 %v948
          %v986 = vunpack.c.l.b16 %v949
          %v987 = vunpack.c.h.b16 %v949
          %v988 = vunpack.c.l.b16 %v950
          %v989 = vunpack.c.h.b16 %v950
          %v990 = vunpack.c.l.b16 %v951
          %v991 = vunpack.c.h.b16 %v951
          %v992 = vunpack.c.l.b16 %v952
          %v993 = vunpack.c.h.b16 %v952
          %v994 = vunpack.c.l.b16 %v953
          %v995 = vunpack.c.h.b16 %v953
          %v996 = vunpack.c.l.b16 %v954
          %v997 = vunpack.c.h.b16 %v954
          %v998 = vunpack.c.l.b16 %v955
          %v999 = vunpack.c.h.b16 %v955
          %v1000 = vunpack.c.l.b16 %v956
          %v1001 = vunpack.c.h.b16 %v956
          %v1002 = vunpack.c.l.b16 %v957
          %v1003 = vunpack.c.h.b16 %v957
          %v1004 = vunpack.c.l.b16 %v958
          %v1005 = vunpack.c.h.b16 %v958
          %v1006 = vunpack.c.l.b16 %v959
          %v1007 = vunpack.c.h.b16 %v959
          %v1008 = vpack.c.b16 %v976, %v976
          %v1009 = vpack.c.b16 %v977, %v977
          %v1010 = vpack.c.b16 %v978, %v978
          %v1011 = vpack.c.b16 %v979, %v979
          %v1012 = vpack.c.b16 %v980, %v980
          %v1013 = vpack.c.b16 %v981, %v981
          %v1014 = vpack.c.b16 %v982, %v982
          %v1015 = vpack.c.b16 %v983, %v983
          %v1016 = vpack.c.b16 %v984, %v984
          %v1017 = vpack.c.b16 %v985, %v985
          %v1018 = vpack.c.b16 %v986, %v986
          %v1019 = vpack.c.b16 %v987, %v987
          %v1020 = vpack.c.b16 %v988, %v988
          %v1021 = vpack.c.b16 %v989, %v989
          %v1022 = vpack.c.b16 %v990, %v990
          %v1023 = vpack.c.b16 %v991, %v991
          %v1024 = vpack.c.b16 %v992, %v992
          %v1025 = vpack.c.b16 %v993, %v993
          %v1026 = vpack.c.b16 %v994, %v994
          %v1027 = vpack.c.b16 %v995, %v995
          %v1028 = vpack.c.b16 %v996, %v996
          %v1029 = vpack.c.b16 %v997, %v997
          %v1030 = vpack.c.b16 %v998, %v998
          %v1031 = vpack.c.b16 %v999, %v999
          %v1032 = vpack.c.b16 %v1000, %v1000
          %v1033 = vpack.c.b16 %v1001, %v1001
          %v1034 = vpack.c.b16 %v1002, %v1002
          %v1035 = vpack.c.b16 %v1003, %v1003
          %v1036 = vpack.c.b16 %v1004, %v1004
          %v1037 = vpack.c.b16 %v1005, %v1005
          %v1038 = vpack.c.b16 %v1006, %v1006
          %v1039 = vpack.c.b16 %v1007, %v1007
          %vm1072 = vcmask 519168
          %1073 = vst.msk [vmem:[%s309] sm:$0xf] %vm1072, %v1008
          %1074 = vst.msk [vmem:[%s309 + $0x4] sm:$0xf] %vm1072, %v1009
          %1075 = vst.msk [vmem:[%s309 + $0x8] sm:$0xf] %vm1072, %v1010
          %1076 = vst.msk [vmem:[%s309 + $0xc] sm:$0xf] %vm1072, %v1011
          %1077 = vst.msk [vmem:[%s309 + $0x10] sm:$0xf] %vm1072, %v1012
          %1078 = vst.msk [vmem:[%s309 + $0x14] sm:$0xf] %vm1072, %v1013
          %1079 = vst.msk [vmem:[%s309 + $0x18] sm:$0xf] %vm1072, %v1014
          %1080 = vst.msk [vmem:[%s309 + $0x1c] sm:$0xf] %vm1072, %v1015
          %1081 = vst.msk [vmem:[%s309 + $0x20] sm:$0xf] %vm1072, %v1016
          %1082 = vst.msk [vmem:[%s309 + $0x24] sm:$0xf] %vm1072, %v1017
          %1083 = vst.msk [vmem:[%s309 + $0x28] sm:$0xf] %vm1072, %v1018
          %1084 = vst.msk [vmem:[%s309 + $0x2c] sm:$0xf] %vm1072, %v1019
          %1085 = vst.msk [vmem:[%s309 + $0x30] sm:$0xf] %vm1072, %v1020
          %1086 = vst.msk [vmem:[%s309 + $0x34] sm:$0xf] %vm1072, %v1021
          %1087 = vst.msk [vmem:[%s309 + $0x38] sm:$0xf] %vm1072, %v1022
          %1088 = vst.msk [vmem:[%s309 + $0x3c] sm:$0xf] %vm1072, %v1023
          %1089 = vst.msk [vmem:[%s309 + $0x40] sm:$0xf] %vm1072, %v1024
          %1090 = vst.msk [vmem:[%s309 + $0x44] sm:$0xf] %vm1072, %v1025
          %1091 = vst.msk [vmem:[%s309 + $0x48] sm:$0xf] %vm1072, %v1026
          %1092 = vst.msk [vmem:[%s309 + $0x4c] sm:$0xf] %vm1072, %v1027
          %1093 = vst.msk [vmem:[%s309 + $0x50] sm:$0xf] %vm1072, %v1028
          %1094 = vst.msk [vmem:[%s309 + $0x54] sm:$0xf] %vm1072, %v1029
          %1095 = vst.msk [vmem:[%s309 + $0x58] sm:$0xf] %vm1072, %v1030
          %1096 = vst.msk [vmem:[%s309 + $0x5c] sm:$0xf] %vm1072, %v1031
          %1097 = vst.msk [vmem:[%s309 + $0x60] sm:$0xf] %vm1072, %v1032
          %1098 = vst.msk [vmem:[%s309 + $0x64] sm:$0xf] %vm1072, %v1033
          %1099 = vst.msk [vmem:[%s309 + $0x68] sm:$0xf] %vm1072, %v1034
          %1100 = vst.msk [vmem:[%s309 + $0x6c] sm:$0xf] %vm1072, %v1035
          %1101 = vst.msk [vmem:[%s309 + $0x70] sm:$0xf] %vm1072, %v1036
          %1102 = vst.msk [vmem:[%s309 + $0x74] sm:$0xf] %vm1072, %v1037
          %1103 = vst.msk [vmem:[%s309 + $0x78] sm:$0xf] %vm1072, %v1038
          %1104 = vst.msk [vmem:[%s309 + $0x7c] sm:$0xf] %vm1072, %v1039
        $region48: #{tpu_custom_call.1} parent=35 // pred_fallthru
          _
        %s1105 = smul.u32 32, %s23
        %p1106 = scmp.lt.s32.totalorder %s1105, 415
        %s1107 = scalar_select %p1106, %s1105, 415
        %p1108 = scmp.lt.s32.totalorder %s24, 0
        %s1109 = scalar_select %p1108, %s24, 0
        %s1110 = sadd.s32 %s1109, %s1107
        %s1111 = smul.addr %s1110, 4
        %s1112 = scalar_lea.vmem %s4, %s1111
        // Predicated region
        $region49: #{tpu_custom_call.1} parent=35 // pred_check
          %p1113 = pneg %p165
        $region50: #{tpu_custom_call.1} parent=35 // pred_check_branch
          %1115 = sbr.rel (%p1113) target = $region52
        $region51: #{tpu_custom_call.1} parent=35 // pred_region
          %s1116 = smul.u32 32, %s23
        $region52: #{tpu_custom_call.1} parent=35 // pred_fallthru
          _
      $region36: #{tpu_custom_call.1} parent=5 // pred_fallthru
        _
      %p1117 = scmp.le.s32.totalorder 2, %s13
      // Predicated region
      $region53: #{tpu_custom_call.1} parent=5 // pred_check
        %p1118 = pneg %p1117
      $region54: #{tpu_custom_call.1} parent=5 // pred_check_branch
        %1120 = sbr.rel (%p1118) target = $region56
      $region55: #{tpu_custom_call.1} parent=5 // pred_region
        %s1121 = ssub.s32 %s13, 2
        // Predicated region
        $region57: #{tpu_custom_call.1} parent=55 // pred_check
          %p1122 = pneg %p171
        $region58: #{tpu_custom_call.1} parent=55 // pred_check_branch
          %1124 = sbr.rel (%p1122) target = $region60
        $region59: #{tpu_custom_call.1} parent=55 // pred_region
          %s1125 = smul.u32 32, %s26
          %p1126 = scmp.lt.s32.totalorder %s1125, 415
          %s1127 = scalar_select %p1126, %s1125, 415
          %p1128 = scmp.lt.s32.totalorder %s27, 0
          %s1129 = scalar_select %p1128, %s27, 0
          %s1130 = sadd.s32 %s1129, %s1127
          %s1131 = smul.addr %s1130, 4
          %s1132 = scalar_lea.vmem %s4, %s1131
        $region60: #{tpu_custom_call.1} parent=55 // pred_fallthru
          _
      $region56: #{tpu_custom_call.1} parent=5 // pred_fallthru
        _
    $region6: #{tpu_custom_call.1} parent=1 // loop_footer
      %s17 = sadd.s32 1, %s13
    $region7: #{tpu_custom_call.1} parent=1 // loop_footer_branch
      %12 = sbr.rel target = $region3
    $region8: #{tpu_custom_call.1} parent=1 // loop_exit
      _
    %1133 = vsyncpa [#allocation4], 1
    %s1134 = scalar_lea.sflag [#allocation4], 1
    %1135 = vsyncpa %s1134, 1

</llo_original>
